<compile_context>
chip_gen: v7x
topology: tpu7x:2x2x1
jax: 0.10.0
libtpu: 0.0.40
codegen_flags: <defaults>
</compile_context>

<pallas_src>
import functools

import jax
import jax.numpy as jnp
from jax import lax
from jax.experimental import pallas as pl
from jax.experimental.pallas import tpu as pltpu

_LANE = 128


def _round_up(x, m):
    return (x + m - 1) // m * m


def _per_row_focal(logits_f32, tgt, alpha, gamma):
    """Per-row focal loss for one (TM, C) tile. Returns (TM, 1) f32."""
    r, c = logits_f32.shape

    # cross_entropy(reduction='none') == -log_softmax(logits)[target]
    m = jnp.max(logits_f32, axis=-1, keepdims=True)
    z = logits_f32 - m
    lse = jnp.log(jnp.sum(jnp.exp(z), axis=-1, keepdims=True))
    logp = z - lse                                             # (TM, C)

    col = lax.broadcasted_iota(jnp.int32, (r, c), 1)
    onehot = (col == tgt).astype(jnp.float32)                  # (TM, C)

    ce = -jnp.sum(onehot * logp, axis=-1, keepdims=True)       # (TM, 1)
    alpha_t = jnp.sum(onehot * alpha, axis=-1, keepdims=True)  # (TM, 1)

    pt = jnp.exp(-ce)
    one_minus_pt = 1.0 - pt
    if float(gamma) == int(gamma):
        focal_w = one_minus_pt ** int(gamma)                   # integer_pow -> VPU muls
    else:
        focal_w = one_minus_pt ** jnp.float32(gamma)
    return alpha_t * focal_w * ce                              # (TM, 1)


def _focal_loss_reduce_kernel(logits_ref, tgt_ref, alpha_ref, out_ref, acc_ref,
                              *, gamma, reduction, n_rows, tile_rows):
    pid = pl.program_id(0)

    @pl.when(pid == 0)
    def _():
        acc_ref[0] = jnp.float32(0.0)

    logits = logits_ref[...].astype(jnp.float32)               # cast in-kernel (bf16 ok)
    f_loss = _per_row_focal(logits, tgt_ref[...], alpha_ref[...], gamma)

    # Mask padded tail rows out of the reduction.
    row = pid * tile_rows + lax.broadcasted_iota(jnp.int32, f_loss.shape, 0)
    f_loss = jnp.where(row < n_rows, f_loss, 0.0)
    acc_ref[0] += jnp.sum(f_loss)

    @pl.when(pid == pl.num_programs(0) - 1)
    def _():
        total = acc_ref[0]
        if reduction == "mean":
            total = total / jnp.float32(n_rows)
        out_ref[0, 0] = total


def _focal_loss_none_kernel(logits_ref, tgt_ref, alpha_ref, out_ref, *, gamma):
    logits = logits_ref[...].astype(jnp.float32)
    f_loss = _per_row_focal(logits, tgt_ref[...], alpha_ref[...], gamma)   # (TM, 1)
    # Sublane column -> lane-dense (TM/128, 128) tile: unmasked full-width stores.
    out_ref[...] = f_loss.reshape(out_ref.shape)


def focal_loss(logits, targets, alpha, *, gamma=2, reduction="mean",
               block_rows=1024):
    """Pallas implementation of FocalLoss.forward.

    logits:  (N, C) float (f32 or bf16)
    targets: (N,)   integer class indices in [0, C)
    alpha:   (C,)   per-class weights
    """
    n, c = logits.shape

    # --- tile-size selection ------------------------------------------------
    if reduction == "none":
        single = _round_up(n, _LANE)
        if single <= block_rows:
            tm = single                                # single tile, block == full array
        else:
            tm = _round_up(block_rows, _LANE * 8)      # (tm//128) % 8 == 0 for out block
    else:
        tm = min(_round_up(block_rows, _LANE), _round_up(n, _LANE))
    n_pad = _round_up(n, tm)

    # --- pad to a whole number of tiles (benign zeros; masked / sliced off) --
    if n_pad != n:
        logits = jnp.pad(logits, ((0, n_pad - n), (0, 0)))
        targets = jnp.pad(targets, (0, n_pad - n))

    tgt2d = targets.reshape(n_pad, 1).astype(jnp.int32)
    alpha2d = jnp.asarray(alpha, jnp.float32).reshape(1, c)

    grid = (n_pad // tm,)
    in_specs = [
        pl.BlockSpec((tm, c), lambda i: (i, 0)),       # logits  (native dtype)
        pl.BlockSpec((tm, 1), lambda i: (i, 0)),       # targets
        pl.BlockSpec((1, c), lambda i: (0, 0)),        # alpha (broadcast)
    ]

    # VMEM budget: double-buffered inputs (+ output tile for 'none') + headroom.
    itemsize = jnp.dtype(logits.dtype).itemsize
    out_tile_bytes = (tm // _LANE) * _LANE * 4 if reduction == "none" else 0
    per_step = 2 * (tm * c * itemsize + tm * 4 + out_tile_bytes) + c * 4
    vmem_limit = int(min(max(2 * per_step, 8 << 20), 96 << 20))

    if reduction in ("mean", "sum"):
        kernel = functools.partial(
            _focal_loss_reduce_kernel, gamma=gamma, reduction=reduction,
            n_rows=n, tile_rows=tm)
        out = pl.pallas_call(
            kernel,
            grid=grid,
            in_specs=in_specs,
            out_specs=pl.BlockSpec(memory_space=pltpu.SMEM),
            out_shape=jax.ShapeDtypeStruct((1, 1), jnp.float32),
            scratch_shapes=[pltpu.SMEM((1,), jnp.float32)],
            compiler_params=pltpu.CompilerParams(
                dimension_semantics=("arbitrary",),
                vmem_limit_bytes=vmem_limit),
        )(logits, tgt2d, alpha2d)
        return out[0, 0]

    # reduction == 'none': lane-dense (n_pad/128, 128) output, unpacked in the wrapper.
    kernel = functools.partial(_focal_loss_none_kernel, gamma=gamma)
    out = pl.pallas_call(
        kernel,
        grid=grid,
        in_specs=in_specs,
        out_specs=pl.BlockSpec((tm // _LANE, _LANE), lambda i: (i, 0)),
        out_shape=jax.ShapeDtypeStruct((n_pad // _LANE, _LANE), jnp.float32),
        compiler_params=pltpu.CompilerParams(
            dimension_semantics=("parallel",),
            vmem_limit_bytes=vmem_limit),
    )(logits, tgt2d, alpha2d)
    return out.reshape(-1)[:n]


def _focal_loss_ref(logits, targets, alpha, *, gamma=2, reduction="mean"):
    """Pure-JAX reference mirroring the PyTorch module."""
    logp = jax.nn.log_softmax(logits.astype(jnp.float32), axis=-1)
    ce = -jnp.take_along_axis(logp, targets[:, None], axis=-1)[:, 0]
    pt = jnp.exp(-ce)
    alpha_t = jnp.asarray(alpha, jnp.float32)[targets]
    f_loss = alpha_t * (1.0 - pt) ** gamma * ce
    if reduction == "mean":
        return f_loss.mean()
    if reduction == "sum":
        return f_loss.sum()
    return f_loss


if __name__ == "__main__":
    key = jax.random.PRNGKey(0)
    k1, k2, k3, k4 = jax.random.split(key, 4)

    # Case 1: tiny f32 problem (single tile), reduction='mean'.
    N1, C1 = 16, 8
    logits1 = jax.random.normal(k1, (N1, C1), dtype=jnp.float32)
    targets1 = jax.random.randint(k2, (N1,), 0, C1, dtype=jnp.int32)
    alpha1 = jnp.linspace(0.5, 1.5, C1, dtype=jnp.float32)
    out1 = jax.block_until_ready(
        focal_loss(logits1, targets1, alpha1, gamma=2, reduction="mean"))
    ref1 = _focal_loss_ref(logits1, targets1, alpha1, gamma=2, reduction="mean")
    assert jnp.allclose(out1, ref1, rtol=1e-5, atol=1e-6), (out1, ref1)

    # Case 2: multi-tile bf16 logits (exercises grid accumulation + tail mask).
    N2, C2 = 2304, 8
    logits2 = jax.random.normal(k3, (N2, C2), dtype=jnp.bfloat16)
    targets2 = jax.random.randint(k4, (N2,), 0, C2, dtype=jnp.int32)
    alpha2 = jnp.linspace(0.25, 1.75, C2, dtype=jnp.float32)
    for red in ("mean", "sum"):
        o = jax.block_until_ready(
            focal_loss(logits2, targets2, alpha2, gamma=2, reduction=red,
                       block_rows=1024))
        r = _focal_loss_ref(logits2, targets2, alpha2, gamma=2, reduction=red)
        assert jnp.allclose(o, r, rtol=1e-4, atol=1e-4), (red, o, r)

    # Case 3: multi-tile 'none' (lane-dense output path).
    o3 = jax.block_until_ready(
        focal_loss(logits2, targets2, alpha2, gamma=2, reduction="none",
                   block_rows=1024))
    r3 = _focal_loss_ref(logits2, targets2, alpha2, gamma=2, reduction="none")
    assert o3.shape == (N2,)
    assert jnp.allclose(o3, r3, rtol=1e-4, atol=1e-5), (o3, r3)

    print("KERNEL_OK")
</pallas_src>

<mosaic_0001>
module attributes {stable_mosaic.version = 11 : i64} {
  func.func @_focal_loss_reduce_kernel(%arg0: i32, %arg1: memref<128x8xf32, #tpu.memory_space<vmem>>, %arg2: memref<128x1xi32, #tpu.memory_space<vmem>>, %arg3: memref<1x8xf32, #tpu.memory_space<vmem>>, %arg4: memref<1x1xf32, #tpu.memory_space<smem>>, %arg5: memref<1xf32, #tpu.memory_space<smem>>) attributes {dimension_semantics = [#tpu.dimension_semantics<arbitrary>], iteration_bounds = array<i64: 1>, scalar_prefetch = 0 : i64, scratch_operands = 1 : i64, tpu.core_type = #tpu.core_type<tc>, window_params = [{transform_indices = @transform_0, window_bounds = array<i64: 128, 8>}, {transform_indices = @transform_1, window_bounds = array<i64: 128, 1>}, {pipeline_mode = #tpu.pipeline_mode<synchronous>, transform_indices = @transform_2, window_bounds = array<i64: 1, 8>}, {transform_indices = @transform_3, window_bounds = array<i64: 1, 1>}]} {
    %c0_i32 = arith.constant 0 : i32
    %0 = arith.cmpi eq, %arg0, %c0_i32 : i32
    %1 = arith.extui %0 : i1 to i32
    %c0_i32_0 = arith.constant 0 : i32
    %2 = arith.cmpi ne, %1, %c0_i32_0 : i32
    scf.if %2 {
      %cst_18 = arith.constant 0.000000e+00 : f32
      %c0_19 = arith.constant 0 : index
      %56 = memref.load %arg5[%c0_19] : memref<1xf32, #tpu.memory_space<smem>>
      memref.store %cst_18, %arg5[%c0_19] : memref<1xf32, #tpu.memory_space<smem>>
    } else {
    }
    %c0 = arith.constant 0 : index
    %c0_1 = arith.constant 0 : index
    %3 = vector.load %arg1[%c0, %c0_1] : memref<128x8xf32, #tpu.memory_space<vmem>>, vector<128x8xf32>
    %c0_2 = arith.constant 0 : index
    %c0_3 = arith.constant 0 : index
    %4 = vector.load %arg2[%c0_2, %c0_3] : memref<128x1xi32, #tpu.memory_space<vmem>>, vector<128x1xi32>
    %c0_4 = arith.constant 0 : index
    %c0_5 = arith.constant 0 : index
    %5 = vector.load %arg3[%c0_4, %c0_5] : memref<1x8xf32, #tpu.memory_space<vmem>>, vector<1x8xf32>
    %cst = arith.constant dense<0xFF800000> : vector<128xf32>
    %6 = vector.multi_reduction <maximumf>, %3, %cst [1] : vector<128x8xf32> to vector<128xf32>
    %7 = vector.shape_cast %6 : vector<128xf32> to vector<128x1xf32>
    %8 = vector.broadcast %7 : vector<128x1xf32> to vector<128x8xf32>
    %9 = arith.subf %3, %8 : vector<128x8xf32>
    %10 = math.exp %9 : vector<128x8xf32>
    %cst_6 = arith.constant dense<0.000000e+00> : vector<128xf32>
    %11 = vector.multi_reduction <add>, %10, %cst_6 [1] : vector<128x8xf32> to vector<128xf32>
    %12 = vector.shape_cast %11 : vector<128xf32> to vector<128x1xf32>
    %13 = math.log %12 : vector<128x1xf32>
    %14 = vector.broadcast %13 : vector<128x1xf32> to vector<128x8xf32>
    %15 = arith.subf %9, %14 : vector<128x8xf32>
    %16 = tpu.iota {dimensions = array<i32: 1>} : vector<128x8xi32>
    %17 = vector.broadcast %4 : vector<128x1xi32> to vector<128x8xi32>
    %18 = arith.cmpi eq, %16, %17 : vector<128x8xi32>
    %19 = arith.extui %18 : vector<128x8xi1> to vector<128x8xi32>
    %20 = arith.sitofp %19 : vector<128x8xi32> to vector<128x8xf32>
    %21 = arith.mulf %20, %15 : vector<128x8xf32>
    %cst_7 = arith.constant dense<0.000000e+00> : vector<128xf32>
    %22 = vector.multi_reduction <add>, %21, %cst_7 [1] : vector<128x8xf32> to vector<128xf32>
    %23 = vector.shape_cast %22 : vector<128xf32> to vector<128x1xf32>
    %cst_8 = arith.constant 0.000000e+00 : f32
    %24 = vector.broadcast %cst_8 : f32 to vector<128x1xf32>
    %25 = arith.subf %24, %23 : vector<128x1xf32>
    %26 = vector.broadcast %5 : vector<1x8xf32> to vector<128x8xf32>
    %27 = arith.mulf %20, %26 : vector<128x8xf32>
    %cst_9 = arith.constant dense<0.000000e+00> : vector<128xf32>
    %28 = vector.multi_reduction <add>, %27, %cst_9 [1] : vector<128x8xf32> to vector<128xf32>
    %29 = vector.shape_cast %28 : vector<128xf32> to vector<128x1xf32>
    %cst_10 = arith.constant 0.000000e+00 : f32
    %30 = vector.broadcast %cst_10 : f32 to vector<128x1xf32>
    %31 = arith.subf %30, %25 : vector<128x1xf32>
    %32 = math.exp %31 : vector<128x1xf32>
    %cst_11 = arith.constant 1.000000e+00 : f32
    %33 = vector.broadcast %cst_11 : f32 to vector<128x1xf32>
    %34 = arith.subf %33, %32 : vector<128x1xf32>
    %35 = arith.mulf %34, %34 : vector<128x1xf32>
    %36 = arith.mulf %29, %35 : vector<128x1xf32>
    %37 = arith.mulf %36, %25 : vector<128x1xf32>
    %c128_i32 = arith.constant 128 : i32
    %38 = arith.muli %arg0, %c128_i32 : i32
    %39 = tpu.iota {dimensions = array<i32: 0>} : vector<128x1xi32>
    %40 = vector.broadcast %38 : i32 to vector<128x1xi32>
    %41 = arith.addi %40, %39 : vector<128x1xi32>
    %c16_i32 = arith.constant 16 : i32
    %42 = vector.broadcast %c16_i32 : i32 to vector<128x1xi32>
    %43 = arith.cmpi slt, %41, %42 : vector<128x1xi32>
    %cst_12 = arith.constant 0.000000e+00 : f32
    %44 = vector.broadcast %cst_12 : f32 to vector<128x1xf32>
    %45 = arith.select %43, %37, %44 : vector<128x1xi1>, vector<128x1xf32>
    %c0_13 = arith.constant 0 : index
    %46 = memref.load %arg5[%c0_13] : memref<1xf32, #tpu.memory_space<smem>>
    %47 = vector.shape_cast %45 : vector<128x1xf32> to vector<1x128x1xf32>
    %cst_14 = arith.constant dense<0.000000e+00> : vector<1xf32>
    %48 = vector.multi_reduction <add>, %47, %cst_14 [1, 2] : vector<1x128x1xf32> to vector<1xf32>
    %49 = vector.shape_cast %48 : vector<1xf32> to vector<1x1x1xf32>
    %50 = vector.extract %49[0, 0, 0] : f32 from vector<1x1x1xf32>
    %51 = arith.addf %46, %50 : f32
    %c0_15 = arith.constant 0 : index
    %52 = memref.load %arg5[%c0_15] : memref<1xf32, #tpu.memory_space<smem>>
    memref.store %51, %arg5[%c0_15] : memref<1xf32, #tpu.memory_space<smem>>
    %c0_i32_16 = arith.constant 0 : i32
    %53 = arith.cmpi eq, %arg0, %c0_i32_16 : i32
    %54 = arith.extui %53 : i1 to i32
    %c0_i32_17 = arith.constant 0 : i32
    %55 = arith.cmpi ne, %54, %c0_i32_17 : i32
    scf.if %55 {
      %c0_18 = arith.constant 0 : index
      %56 = memref.load %arg5[%c0_18] : memref<1xf32, #tpu.memory_space<smem>>
      %cst_19 = arith.constant 1.600000e+01 : f32
      %57 = arith.divf %56, %cst_19 : f32
      %c0_20 = arith.constant 0 : index
      %c0_21 = arith.constant 0 : index
      %58 = memref.load %arg4[%c0_20, %c0_21] : memref<1x1xf32, #tpu.memory_space<smem>>
      memref.store %57, %arg4[%c0_20, %c0_21] : memref<1x1xf32, #tpu.memory_space<smem>>
    } else {
    }
    return
  }
  func.func @transform_0(%arg0: i32) -> (i32, i32) {
    %c0_i32 = arith.constant 0 : i32
    %c0_i32_0 = arith.constant 0 : i32
    return %arg0, %c0_i32 : i32, i32
  }
  func.func @transform_1(%arg0: i32) -> (i32, i32) {
    %c0_i32 = arith.constant 0 : i32
    %c0_i32_0 = arith.constant 0 : i32
    return %arg0, %c0_i32 : i32, i32
  }
  func.func @transform_2(%arg0: i32) -> (i32, i32) {
    %c0_i32 = arith.constant 0 : i32
    %c0_i32_0 = arith.constant 0 : i32
    %c0_i32_1 = arith.constant 0 : i32
    return %c0_i32, %c0_i32_0 : i32, i32
  }
  func.func @transform_3(%arg0: i32) -> (i32, i32) {
    %c0_i32 = arith.constant 0 : i32
    %c0_i32_0 = arith.constant 0 : i32
    %c0_i32_1 = arith.constant 0 : i32
    return %c0_i32, %c0_i32_0 : i32, i32
  }
}

</mosaic_0001>

<llo_original>
// kernel: tpu_custom_call.1
$region0: #{tpu_custom_call.1}
  #allocation0 [shape = 'u32[]', space=smem, size = 0x4, offset = 0x4, fixed_abs, tag = 'smem constant byte address 0x4 - core index']
  #allocation1 [shape = 'u32[144,128]{1,0:T(1,128)}', space=vmem, size = 0x12000, scoped, tag = 'internal scratch']
  #allocation2 [shape = 'f32[1]{0:T(128)}', space=smem, size = 0x200, scoped, tag = 'scratch operand']
  %s0 = inlined_call_operand.vmem [shape: f32[128,8], index: 0, kind: input, shape index: {}]
  %s1 = inlined_call_operand.vmem [shape: s32[128,1], index: 1, kind: input, shape index: {}]
  %s2 = inlined_call_operand.vmem [shape: f32[1,8], index: 2, kind: input, shape index: {}]
  %s3 = inlined_call_operand.hbm [shape: f32[1,1], index: 3, kind: output, shape index: {}]
  %s4 = sld [smem:[#allocation0]]
  $region30: #{tpu_custom_call.1} parent=0
    _
  %s6 = ssub.s32 1, %s4
  %s7 = scalar_select 0, %s6, %s4
  $region1: #{tpu_custom_call.1} parent=0
    #allocation3 [shape = 'u8[512]{0}', space=smem, size = 0x200, scoped, tag = 'output window, operand 0, single buffered']
    #allocation4 [shape = 's32[1]{0}', space=sflag, size = 0x4, scoped, tag = 'scoped memory for tpu_custom_call.1']
    %8 = vsyncpa [#allocation4], 0
    // Predicated region
    $region2: #{tpu_custom_call.1} parent=1 // pred_check
      _
    $region3: #{tpu_custom_call.1} parent=1 // pred_check_branch
      %10 = sbr.rel (0) target = $region5
    $region4: #{tpu_custom_call.1} parent=1 // pred_region
      _
    $region5: #{tpu_custom_call.1} parent=1 // pred_fallthru
      _
    // Predicated region
    $region6: #{tpu_custom_call.1} parent=1 // pred_check
      _
    $region7: #{tpu_custom_call.1} parent=1 // pred_check_branch
      %12 = sbr.rel (0) target = $region9
    $region8: #{tpu_custom_call.1} parent=1 // pred_region
      _
    $region9: #{tpu_custom_call.1} parent=1 // pred_fallthru
      _
    // Predicated region
    $region10: #{tpu_custom_call.1} parent=1 // pred_check
      _
    $region11: #{tpu_custom_call.1} parent=1 // pred_check_branch
      %14 = sbr.rel (0) target = $region13
    $region12: #{tpu_custom_call.1} parent=1 // pred_region
      _
    $region13: #{tpu_custom_call.1} parent=1 // pred_fallthru
      _
    %p15 = scmp.eq.s32.totalorder 0, 0
    // Predicated region
    $region14: #{tpu_custom_call.1} parent=1 // pred_check
      %p16 = pneg %p15
    $region15: #{tpu_custom_call.1} parent=1 // pred_check_branch
      %18 = sbr.rel (%p16) target = $region17
    $region16: #{tpu_custom_call.1} parent=1 // pred_region
      %s19 = scalar_lea.smem [#allocation2], 0
      %20 = sst [smem:[%s19]] 0.0
    $region17: #{tpu_custom_call.1} parent=1 // pred_fallthru
      _
    %v21 = vld [vmem:[%s0] sm:$0xff]
    %v22 = vld [vmem:[%s0 + $0x8] sm:$0xff]
    %v23 = vld [vmem:[%s0 + $0x10] sm:$0xff]
    %v24 = vld [vmem:[%s0 + $0x18] sm:$0xff]
    %v25 = vld [vmem:[%s0 + $0x20] sm:$0xff]
    %v26 = vld [vmem:[%s0 + $0x28] sm:$0xff]
    %v27 = vld [vmem:[%s0 + $0x30] sm:$0xff]
    %v28 = vld [vmem:[%s0 + $0x38] sm:$0xff]
    %v29 = vld [vmem:[%s0 + $0x40] sm:$0xff]
    %v30 = vld [vmem:[%s0 + $0x48] sm:$0xff]
    %v31 = vld [vmem:[%s0 + $0x50] sm:$0xff]
    %v32 = vld [vmem:[%s0 + $0x58] sm:$0xff]
    %v33 = vld [vmem:[%s0 + $0x60] sm:$0xff]
    %v34 = vld [vmem:[%s0 + $0x68] sm:$0xff]
    %v35 = vld [vmem:[%s0 + $0x70] sm:$0xff]
    %v36 = vld [vmem:[%s0 + $0x78] sm:$0xff]
    %v37 = vld [vmem:[%s1] sm:$0xff]
    %v38 = vld [vmem:[%s1 + $0x8] sm:$0xff]
    %v39 = vld [vmem:[%s1 + $0x10] sm:$0xff]
    %v40 = vld [vmem:[%s1 + $0x18] sm:$0xff]
    %v41 = vld [vmem:[%s1 + $0x20] sm:$0xff]
    %v42 = vld [vmem:[%s1 + $0x28] sm:$0xff]
    %v43 = vld [vmem:[%s1 + $0x30] sm:$0xff]
    %v44 = vld [vmem:[%s1 + $0x38] sm:$0xff]
    %v45 = vld [vmem:[%s1 + $0x40] sm:$0xff]
    %v46 = vld [vmem:[%s1 + $0x48] sm:$0xff]
    %v47 = vld [vmem:[%s1 + $0x50] sm:$0xff]
    %v48 = vld [vmem:[%s1 + $0x58] sm:$0xff]
    %v49 = vld [vmem:[%s1 + $0x60] sm:$0xff]
    %v50 = vld [vmem:[%s1 + $0x68] sm:$0xff]
    %v51 = vld [vmem:[%s1 + $0x70] sm:$0xff]
    %v52 = vld [vmem:[%s1 + $0x78] sm:$0xff]
    %v53 = vld [vmem:[%s2] sm:$0x1]
    %vm54 = vcmask 64512
    %v55 = vsel %vm54, %v21, -inf
    %56 = vmax.xlane.f32.xlu0 %v55
    %v57 = vpop.xlane.xlu0 %56
    %v58 = vsel %vm54, %v22, -inf
    %59 = vmax.xlane.f32.xlu0 %v58
    %v60 = vpop.xlane.xlu0 %59
    %v61 = vsel %vm54, %v23, -inf
    %62 = vmax.xlane.f32.xlu0 %v61
    %v63 = vpop.xlane.xlu0 %62
    %v64 = vsel %vm54, %v24, -inf
    %65 = vmax.xlane.f32.xlu0 %v64
    %v66 = vpop.xlane.xlu0 %65
    %v67 = vsel %vm54, %v25, -inf
    %68 = vmax.xlane.f32.xlu0 %v67
    %v69 = vpop.xlane.xlu0 %68
    %v70 = vsel %vm54, %v26, -inf
    %71 = vmax.xlane.f32.xlu0 %v70
    %v72 = vpop.xlane.xlu0 %71
    %v73 = vsel %vm54, %v27, -inf
    %74 = vmax.xlane.f32.xlu0 %v73
    %v75 = vpop.xlane.xlu0 %74
    %v76 = vsel %vm54, %v28, -inf
    %77 = vmax.xlane.f32.xlu0 %v76
    %v78 = vpop.xlane.xlu0 %77
    %v79 = vsel %vm54, %v29, -inf
    %80 = vmax.xlane.f32.xlu0 %v79
    %v81 = vpop.xlane.xlu0 %80
    %v82 = vsel %vm54, %v30, -inf
    %83 = vmax.xlane.f32.xlu0 %v82
    %v84 = vpop.xlane.xlu0 %83
    %v85 = vsel %vm54, %v31, -inf
    %86 = vmax.xlane.f32.xlu0 %v85
    %v87 = vpop.xlane.xlu0 %86
    %v88 = vsel %vm54, %v32, -inf
    %89 = vmax.xlane.f32.xlu0 %v88
    %v90 = vpop.xlane.xlu0 %89
    %v91 = vsel %vm54, %v33, -inf
    %92 = vmax.xlane.f32.xlu0 %v91
    %v93 = vpop.xlane.xlu0 %92
    %v94 = vsel %vm54, %v34, -inf
    %95 = vmax.xlane.f32.xlu0 %v94
    %v96 = vpop.xlane.xlu0 %95
    %v97 = vsel %vm54, %v35, -inf
    %98 = vmax.xlane.f32.xlu0 %v97
    %v99 = vpop.xlane.xlu0 %98
    %v100 = vsel %vm54, %v36, -inf
    %101 = vmax.xlane.f32.xlu0 %v100
    %v102 = vpop.xlane.xlu0 %101
    %v103 = vsub.f32 %v21, %v57
    %v104 = vsub.f32 %v22, %v60
    %v105 = vsub.f32 %v23, %v63
    %v106 = vsub.f32 %v24, %v66
    %v107 = vsub.f32 %v25, %v69
    %v108 = vsub.f32 %v26, %v72
    %v109 = vsub.f32 %v27, %v75
    %v110 = vsub.f32 %v28, %v78
    %v111 = vsub.f32 %v29, %v81
    %v112 = vsub.f32 %v30, %v84
    %v113 = vsub.f32 %v31, %v87
    %v114 = vsub.f32 %v32, %v90
    %v115 = vsub.f32 %v33, %v93
    %v116 = vsub.f32 %v34, %v96
    %v117 = vsub.f32 %v35, %v99
    %v118 = vsub.f32 %v36, %v102
    %v119 = vmul.f32 %v103, 1.442695
    %v120 = vpow.pop %v119
    %v121 = vmul.f32 %v104, 1.442695
    %v122 = vpow.pop %v121
    %v123 = vmul.f32 %v105, 1.442695
    %v124 = vpow.pop %v123
    %v125 = vmul.f32 %v106, 1.442695
    %v126 = vpow.pop %v125
    %v127 = vmul.f32 %v107, 1.442695
    %v128 = vpow.pop %v127
    %v129 = vmul.f32 %v108, 1.442695
    %v130 = vpow.pop %v129
    %v131 = vmul.f32 %v109, 1.442695
    %v132 = vpow.pop %v131
    %v133 = vmul.f32 %v110, 1.442695
    %v134 = vpow.pop %v133
    %v135 = vmul.f32 %v111, 1.442695
    %v136 = vpow.pop %v135
    %v137 = vmul.f32 %v112, 1.442695
    %v138 = vpow.pop %v137
    %v139 = vmul.f32 %v113, 1.442695
    %v140 = vpow.pop %v139
    %v141 = vmul.f32 %v114, 1.442695
    %v142 = vpow.pop %v141
    %v143 = vmul.f32 %v115, 1.442695
    %v144 = vpow.pop %v143
    %v145 = vmul.f32 %v116, 1.442695
    %v146 = vpow.pop %v145
    %v147 = vmul.f32 %v117, 1.442695
    %v148 = vpow.pop %v147
    %v149 = vmul.f32 %v118, 1.442695
    %v150 = vpow.pop %v149
    %v151 = vsel %vm54, %v120, 0.0
    %152 = vadd.xlane.f32.xlu0 %v151
    %v153 = vpop.xlane.xlu0 %152
    %v154 = vsel %vm54, %v122, 0.0
    %155 = vadd.xlane.f32.xlu0 %v154
    %v156 = vpop.xlane.xlu0 %155
    %v157 = vsel %vm54, %v124, 0.0
    %158 = vadd.xlane.f32.xlu0 %v157
    %v159 = vpop.xlane.xlu0 %158
    %v160 = vsel %vm54, %v126, 0.0
    %161 = vadd.xlane.f32.xlu0 %v160
    %v162 = vpop.xlane.xlu0 %161
    %v163 = vsel %vm54, %v128, 0.0
    %164 = vadd.xlane.f32.xlu0 %v163
    %v165 = vpop.xlane.xlu0 %164
    %v166 = vsel %vm54, %v130, 0.0
    %167 = vadd.xlane.f32.xlu0 %v166
    %v168 = vpop.xlane.xlu0 %167
    %v169 = vsel %vm54, %v132, 0.0
    %170 = vadd.xlane.f32.xlu0 %v169
    %v171 = vpop.xlane.xlu0 %170
    %v172 = vsel %vm54, %v134, 0.0
    %173 = vadd.xlane.f32.xlu0 %v172
    %v174 = vpop.xlane.xlu0 %173
    %v175 = vsel %vm54, %v136, 0.0
    %176 = vadd.xlane.f32.xlu0 %v175
    %v177 = vpop.xlane.xlu0 %176
    %v178 = vsel %vm54, %v138, 0.0
    %179 = vadd.xlane.f32.xlu0 %v178
    %v180 = vpop.xlane.xlu0 %179
    %v181 = vsel %vm54, %v140, 0.0
    %182 = vadd.xlane.f32.xlu0 %v181
    %v183 = vpop.xlane.xlu0 %182
    %v184 = vsel %vm54, %v142, 0.0
    %185 = vadd.xlane.f32.xlu0 %v184
    %v186 = vpop.xlane.xlu0 %185
    %v187 = vsel %vm54, %v144, 0.0
    %188 = vadd.xlane.f32.xlu0 %v187
    %v189 = vpop.xlane.xlu0 %188
    %v190 = vsel %vm54, %v146, 0.0
    %191 = vadd.xlane.f32.xlu0 %v190
    %v192 = vpop.xlane.xlu0 %191
    %v193 = vsel %vm54, %v148, 0.0
    %194 = vadd.xlane.f32.xlu0 %v193
    %v195 = vpop.xlane.xlu0 %194
    %v196 = vsel %vm54, %v150, 0.0
    %197 = vadd.xlane.f32.xlu0 %v196
    %v198 = vpop.xlane.xlu0 %197
    %v199 = vlog2.pop %v153
    %v200 = vmul.f32 %v199, 0.6931472
    %v201 = vlog2.pop %v156
    %v202 = vmul.f32 %v201, 0.6931472
    %v203 = vlog2.pop %v159
    %v204 = vmul.f32 %v203, 0.6931472
    %v205 = vlog2.pop %v162
    %v206 = vmul.f32 %v205, 0.6931472
    %v207 = vlog2.pop %v165
    %v208 = vmul.f32 %v207, 0.6931472
    %v209 = vlog2.pop %v168
    %v210 = vmul.f32 %v209, 0.6931472
    %v211 = vlog2.pop %v171
    %v212 = vmul.f32 %v211, 0.6931472
    %v213 = vlog2.pop %v174
    %v214 = vmul.f32 %v213, 0.6931472
    %v215 = vlog2.pop %v177
    %v216 = vmul.f32 %v215, 0.6931472
    %v217 = vlog2.pop %v180
    %v218 = vmul.f32 %v217, 0.6931472
    %v219 = vlog2.pop %v183
    %v220 = vmul.f32 %v219, 0.6931472
    %v221 = vlog2.pop %v186
    %v222 = vmul.f32 %v221, 0.6931472
    %v223 = vlog2.pop %v189
    %v224 = vmul.f32 %v223, 0.6931472
    %v225 = vlog2.pop %v192
    %v226 = vmul.f32 %v225, 0.6931472
    %v227 = vlog2.pop %v195
    %v228 = vmul.f32 %v227, 0.6931472
    %v229 = vlog2.pop %v198
    %v230 = vmul.f32 %v229, 0.6931472
    %v231 = vsub.f32 %v103, %v200
    %v232 = vsub.f32 %v104, %v202
    %v233 = vsub.f32 %v105, %v204
    %v234 = vsub.f32 %v106, %v206
    %v235 = vsub.f32 %v107, %v208
    %v236 = vsub.f32 %v108, %v210
    %v237 = vsub.f32 %v109, %v212
    %v238 = vsub.f32 %v110, %v214
    %v239 = vsub.f32 %v111, %v216
    %v240 = vsub.f32 %v112, %v218
    %v241 = vsub.f32 %v113, %v220
    %v242 = vsub.f32 %v114, %v222
    %v243 = vsub.f32 %v115, %v224
    %v244 = vsub.f32 %v116, %v226
    %v245 = vsub.f32 %v117, %v228
    %v246 = vsub.f32 %v118, %v230
    %v247 = vlaneseq
    %v248 = vand.u32 %v247, 127
    %249 = vset.pattern.permute.xlu0 0
    %250 = vperm.xlu0 %249, %v37
    %v251 = vpop.permute.xlu0 %250
    %252 = vset.pattern.permute.xlu0 0
    %253 = vperm.xlu0 %252, %v38
    %v254 = vpop.permute.xlu0 %253
    %255 = vset.pattern.permute.xlu0 0
    %256 = vperm.xlu0 %255, %v39
    %v257 = vpop.permute.xlu0 %256
    %258 = vset.pattern.permute.xlu0 0
    %259 = vperm.xlu0 %258, %v40
    %v260 = vpop.permute.xlu0 %259
    %261 = vset.pattern.permute.xlu0 0
    %262 = vperm.xlu0 %261, %v41
    %v263 = vpop.permute.xlu0 %262
    %264 = vset.pattern.permute.xlu0 0
    %265 = vperm.xlu0 %264, %v42
    %v266 = vpop.permute.xlu0 %265
    %267 = vset.pattern.permute.xlu0 0
    %268 = vperm.xlu0 %267, %v43
    %v269 = vpop.permute.xlu0 %268
    %270 = vset.pattern.permute.xlu0 0
    %271 = vperm.xlu0 %270, %v44
    %v272 = vpop.permute.xlu0 %271
    %273 = vset.pattern.permute.xlu0 0
    %274 = vperm.xlu0 %273, %v45
    %v275 = vpop.permute.xlu0 %274
    %276 = vset.pattern.permute.xlu0 0
    %277 = vperm.xlu0 %276, %v46
    %v278 = vpop.permute.xlu0 %277
    %279 = vset.pattern.permute.xlu0 0
    %280 = vperm.xlu0 %279, %v47
    %v281 = vpop.permute.xlu0 %280
    %282 = vset.pattern.permute.xlu0 0
    %283 = vperm.xlu0 %282, %v48
    %v284 = vpop.permute.xlu0 %283
    %285 = vset.pattern.permute.xlu0 0
    %286 = vperm.xlu0 %285, %v49
    %v287 = vpop.permute.xlu0 %286
    %288 = vset.pattern.permute.xlu0 0
    %289 = vperm.xlu0 %288, %v50
    %v290 = vpop.permute.xlu0 %289
    %291 = vset.pattern.permute.xlu0 0
    %292 = vperm.xlu0 %291, %v51
    %v293 = vpop.permute.xlu0 %292
    %294 = vset.pattern.permute.xlu0 0
    %295 = vperm.xlu0 %294, %v52
    %v296 = vpop.permute.xlu0 %295
    %vm297 = vcmp.eq.s32.totalorder %v248, %v251
    %vm298 = vcmp.eq.s32.totalorder %v248, %v254
    %vm299 = vcmp.eq.s32.totalorder %v248, %v257
    %vm300 = vcmp.eq.s32.totalorder %v248, %v260
    %vm301 = vcmp.eq.s32.totalorder %v248, %v263
    %vm302 = vcmp.eq.s32.totalorder %v248, %v266
    %vm303 = vcmp.eq.s32.totalorder %v248, %v269
    %vm304 = vcmp.eq.s32.totalorder %v248, %v272
    %vm305 = vcmp.eq.s32.totalorder %v248, %v275
    %vm306 = vcmp.eq.s32.totalorder %v248, %v278
    %vm307 = vcmp.eq.s32.totalorder %v248, %v281
    %vm308 = vcmp.eq.s32.totalorder %v248, %v284
    %vm309 = vcmp.eq.s32.totalorder %v248, %v287
    %vm310 = vcmp.eq.s32.totalorder %v248, %v290
    %vm311 = vcmp.eq.s32.totalorder %v248, %v293
    %vm312 = vcmp.eq.s32.totalorder %v248, %v296
    %v313 = vsel %vm297, 1, 0
    %v314 = vsel %vm298, 1, 0
    %v315 = vsel %vm299, 1, 0
    %v316 = vsel %vm300, 1, 0
    %v317 = vsel %vm301, 1, 0
    %v318 = vsel %vm302, 1, 0
    %v319 = vsel %vm303, 1, 0
    %v320 = vsel %vm304, 1, 0
    %v321 = vsel %vm305, 1, 0
    %v322 = vsel %vm306, 1, 0
    %v323 = vsel %vm307, 1, 0
    %v324 = vsel %vm308, 1, 0
    %v325 = vsel %vm309, 1, 0
    %v326 = vsel %vm310, 1, 0
    %v327 = vsel %vm311, 1, 0
    %v328 = vsel %vm312, 1, 0
    %v329 = vcvt.s32.f32 %v313
    %v330 = vcvt.s32.f32 %v314
    %v331 = vcvt.s32.f32 %v315
    %v332 = vcvt.s32.f32 %v316
    %v333 = vcvt.s32.f32 %v317
    %v334 = vcvt.s32.f32 %v318
    %v335 = vcvt.s32.f32 %v319
    %v336 = vcvt.s32.f32 %v320
    %v337 = vcvt.s32.f32 %v321
    %v338 = vcvt.s32.f32 %v322
    %v339 = vcvt.s32.f32 %v323
    %v340 = vcvt.s32.f32 %v324
    %v341 = vcvt.s32.f32 %v325
    %v342 = vcvt.s32.f32 %v326
    %v343 = vcvt.s32.f32 %v327
    %v344 = vcvt.s32.f32 %v328
    %v345 = vmul.f32 %v329, %v231
    %v346 = vmul.f32 %v330, %v232
    %v347 = vmul.f32 %v331, %v233
    %v348 = vmul.f32 %v332, %v234
    %v349 = vmul.f32 %v333, %v235
    %v350 = vmul.f32 %v334, %v236
    %v351 = vmul.f32 %v335, %v237
    %v352 = vmul.f32 %v336, %v238
    %v353 = vmul.f32 %v337, %v239
    %v354 = vmul.f32 %v338, %v240
    %v355 = vmul.f32 %v339, %v241
    %v356 = vmul.f32 %v340, %v242
    %v357 = vmul.f32 %v341, %v243
    %v358 = vmul.f32 %v342, %v244
    %v359 = vmul.f32 %v343, %v245
    %v360 = vmul.f32 %v344, %v246
    %v361 = vsel %vm54, %v345, 0.0
    %362 = vadd.xlane.f32.xlu0 %v361
    %v363 = vpop.xlane.xlu0 %362
    %v364 = vsel %vm54, %v346, 0.0
    %365 = vadd.xlane.f32.xlu0 %v364
    %v366 = vpop.xlane.xlu0 %365
    %v367 = vsel %vm54, %v347, 0.0
    %368 = vadd.xlane.f32.xlu0 %v367
    %v369 = vpop.xlane.xlu0 %368
    %v370 = vsel %vm54, %v348, 0.0
    %371 = vadd.xlane.f32.xlu0 %v370
    %v372 = vpop.xlane.xlu0 %371
    %v373 = vsel %vm54, %v349, 0.0
    %374 = vadd.xlane.f32.xlu0 %v373
    %v375 = vpop.xlane.xlu0 %374
    %v376 = vsel %vm54, %v350, 0.0
    %377 = vadd.xlane.f32.xlu0 %v376
    %v378 = vpop.xlane.xlu0 %377
    %v379 = vsel %vm54, %v351, 0.0
    %380 = vadd.xlane.f32.xlu0 %v379
    %v381 = vpop.xlane.xlu0 %380
    %v382 = vsel %vm54, %v352, 0.0
    %383 = vadd.xlane.f32.xlu0 %v382
    %v384 = vpop.xlane.xlu0 %383
    %v385 = vsel %vm54, %v353, 0.0
    %386 = vadd.xlane.f32.xlu0 %v385
    %v387 = vpop.xlane.xlu0 %386
    %v388 = vsel %vm54, %v354, 0.0
    %389 = vadd.xlane.f32.xlu0 %v388
    %v390 = vpop.xlane.xlu0 %389
    %v391 = vsel %vm54, %v355, 0.0
    %392 = vadd.xlane.f32.xlu0 %v391
    %v393 = vpop.xlane.xlu0 %392
    %v394 = vsel %vm54, %v356, 0.0
    %395 = vadd.xlane.f32.xlu0 %v394
    %v396 = vpop.xlane.xlu0 %395
    %v397 = vsel %vm54, %v357, 0.0
    %398 = vadd.xlane.f32.xlu0 %v397
    %v399 = vpop.xlane.xlu0 %398
    %v400 = vsel %vm54, %v358, 0.0
    %401 = vadd.xlane.f32.xlu0 %v400
    %v402 = vpop.xlane.xlu0 %401
    %v403 = vsel %vm54, %v359, 0.0
    %404 = vadd.xlane.f32.xlu0 %v403
    %v405 = vpop.xlane.xlu0 %404
    %v406 = vsel %vm54, %v360, 0.0
    %407 = vadd.xlane.f32.xlu0 %v406
    %v408 = vpop.xlane.xlu0 %407
    %v409 = vsub.f32 0.0, %v363
    %v410 = vsub.f32 0.0, %v366
    %v411 = vsub.f32 0.0, %v369
    %v412 = vsub.f32 0.0, %v372
    %v413 = vsub.f32 0.0, %v375
    %v414 = vsub.f32 0.0, %v378
    %v415 = vsub.f32 0.0, %v381
    %v416 = vsub.f32 0.0, %v384
    %v417 = vsub.f32 0.0, %v387
    %v418 = vsub.f32 0.0, %v390
    %v419 = vsub.f32 0.0, %v393
    %v420 = vsub.f32 0.0, %v396
    %v421 = vsub.f32 0.0, %v399
    %v422 = vsub.f32 0.0, %v402
    %v423 = vsub.f32 0.0, %v405
    %v424 = vsub.f32 0.0, %v408
    %v426 = vlaneseq
    %v427 = vshrl.u32 %v426, 7
    %v428 = vsub.s32 0, %v427
    %v429 = vrot.slane %v53, %v428
    %v431 = vmul.f32 %v329, %v429
    %v432 = vmul.f32 %v330, %v429
    %v433 = vmul.f32 %v331, %v429
    %v434 = vmul.f32 %v332, %v429
    %v435 = vmul.f32 %v333, %v429
    %v436 = vmul.f32 %v334, %v429
    %v437 = vmul.f32 %v335, %v429
    %v438 = vmul.f32 %v336, %v429
    %v439 = vmul.f32 %v337, %v429
    %v440 = vmul.f32 %v338, %v429
    %v441 = vmul.f32 %v339, %v429
    %v442 = vmul.f32 %v340, %v429
    %v443 = vmul.f32 %v341, %v429
    %v444 = vmul.f32 %v342, %v429
    %v445 = vmul.f32 %v343, %v429
    %v446 = vmul.f32 %v344, %v429
    %v447 = vsel %vm54, %v431, 0.0
    %448 = vadd.xlane.f32.xlu0 %v447
    %v449 = vpop.xlane.xlu0 %448
    %v450 = vsel %vm54, %v432, 0.0
    %451 = vadd.xlane.f32.xlu0 %v450
    %v452 = vpop.xlane.xlu0 %451
    %v453 = vsel %vm54, %v433, 0.0
    %454 = vadd.xlane.f32.xlu0 %v453
    %v455 = vpop.xlane.xlu0 %454
    %v456 = vsel %vm54, %v434, 0.0
    %457 = vadd.xlane.f32.xlu0 %v456
    %v458 = vpop.xlane.xlu0 %457
    %v459 = vsel %vm54, %v435, 0.0
    %460 = vadd.xlane.f32.xlu0 %v459
    %v461 = vpop.xlane.xlu0 %460
    %v462 = vsel %vm54, %v436, 0.0
    %463 = vadd.xlane.f32.xlu0 %v462
    %v464 = vpop.xlane.xlu0 %463
    %v465 = vsel %vm54, %v437, 0.0
    %466 = vadd.xlane.f32.xlu0 %v465
    %v467 = vpop.xlane.xlu0 %466
    %v468 = vsel %vm54, %v438, 0.0
    %469 = vadd.xlane.f32.xlu0 %v468
    %v470 = vpop.xlane.xlu0 %469
    %v471 = vsel %vm54, %v439, 0.0
    %472 = vadd.xlane.f32.xlu0 %v471
    %v473 = vpop.xlane.xlu0 %472
    %v474 = vsel %vm54, %v440, 0.0
    %475 = vadd.xlane.f32.xlu0 %v474
    %v476 = vpop.xlane.xlu0 %475
    %v477 = vsel %vm54, %v441, 0.0
    %478 = vadd.xlane.f32.xlu0 %v477
    %v479 = vpop.xlane.xlu0 %478
    %v480 = vsel %vm54, %v442, 0.0
    %481 = vadd.xlane.f32.xlu0 %v480
    %v482 = vpop.xlane.xlu0 %481
    %v483 = vsel %vm54, %v443, 0.0
    %484 = vadd.xlane.f32.xlu0 %v483
    %v485 = vpop.xlane.xlu0 %484
    %v486 = vsel %vm54, %v444, 0.0
    %487 = vadd.xlane.f32.xlu0 %v486
    %v488 = vpop.xlane.xlu0 %487
    %v489 = vsel %vm54, %v445, 0.0
    %490 = vadd.xlane.f32.xlu0 %v489
    %v491 = vpop.xlane.xlu0 %490
    %v492 = vsel %vm54, %v446, 0.0
    %493 = vadd.xlane.f32.xlu0 %v492
    %v494 = vpop.xlane.xlu0 %493
    %v495 = vsub.f32 0.0, %v409
    %v496 = vsub.f32 0.0, %v410
    %v497 = vsub.f32 0.0, %v411
    %v498 = vsub.f32 0.0, %v412
    %v499 = vsub.f32 0.0, %v413
    %v500 = vsub.f32 0.0, %v414
    %v501 = vsub.f32 0.0, %v415
    %v502 = vsub.f32 0.0, %v416
    %v503 = vsub.f32 0.0, %v417
    %v504 = vsub.f32 0.0, %v418
    %v505 = vsub.f32 0.0, %v419
    %v506 = vsub.f32 0.0, %v420
    %v507 = vsub.f32 0.0, %v421
    %v508 = vsub.f32 0.0, %v422
    %v509 = vsub.f32 0.0, %v423
    %v510 = vsub.f32 0.0, %v424
    %v511 = vmul.f32 %v495, 1.442695
    %v512 = vpow.pop %v511
    %v513 = vmul.f32 %v496, 1.442695
    %v514 = vpow.pop %v513
    %v515 = vmul.f32 %v497, 1.442695
    %v516 = vpow.pop %v515
    %v517 = vmul.f32 %v498, 1.442695
    %v518 = vpow.pop %v517
    %v519 = vmul.f32 %v499, 1.442695
    %v520 = vpow.pop %v519
    %v521 = vmul.f32 %v500, 1.442695
    %v522 = vpow.pop %v521
    %v523 = vmul.f32 %v501, 1.442695
    %v524 = vpow.pop %v523
    %v525 = vmul.f32 %v502, 1.442695
    %v526 = vpow.pop %v525
    %v527 = vmul.f32 %v503, 1.442695
    %v528 = vpow.pop %v527
    %v529 = vmul.f32 %v504, 1.442695
    %v530 = vpow.pop %v529
    %v531 = vmul.f32 %v505, 1.442695
    %v532 = vpow.pop %v531
    %v533 = vmul.f32 %v506, 1.442695
    %v534 = vpow.pop %v533
    %v535 = vmul.f32 %v507, 1.442695
    %v536 = vpow.pop %v535
    %v537 = vmul.f32 %v508, 1.442695
    %v538 = vpow.pop %v537
    %v539 = vmul.f32 %v509, 1.442695
    %v540 = vpow.pop %v539
    %v541 = vmul.f32 %v510, 1.442695
    %v542 = vpow.pop %v541
    %v543 = vsub.f32 1.0, %v512
    %v544 = vsub.f32 1.0, %v514
    %v545 = vsub.f32 1.0, %v516
    %v546 = vsub.f32 1.0, %v518
    %v547 = vsub.f32 1.0, %v520
    %v548 = vsub.f32 1.0, %v522
    %v549 = vsub.f32 1.0, %v524
    %v550 = vsub.f32 1.0, %v526
    %v551 = vsub.f32 1.0, %v528
    %v552 = vsub.f32 1.0, %v530
    %v553 = vsub.f32 1.0, %v532
    %v554 = vsub.f32 1.0, %v534
    %v555 = vsub.f32 1.0, %v536
    %v556 = vsub.f32 1.0, %v538
    %v557 = vsub.f32 1.0, %v540
    %v558 = vsub.f32 1.0, %v542
    %v559 = vmul.f32 %v543, %v543
    %v560 = vmul.f32 %v544, %v544
    %v561 = vmul.f32 %v545, %v545
    %v562 = vmul.f32 %v546, %v546
    %v563 = vmul.f32 %v547, %v547
    %v564 = vmul.f32 %v548, %v548
    %v565 = vmul.f32 %v549, %v549
    %v566 = vmul.f32 %v550, %v550
    %v567 = vmul.f32 %v551, %v551
    %v568 = vmul.f32 %v552, %v552
    %v569 = vmul.f32 %v553, %v553
    %v570 = vmul.f32 %v554, %v554
    %v571 = vmul.f32 %v555, %v555
    %v572 = vmul.f32 %v556, %v556
    %v573 = vmul.f32 %v557, %v557
    %v574 = vmul.f32 %v558, %v558
    %v575 = vmul.f32 %v449, %v559
    %v576 = vmul.f32 %v452, %v560
    %v577 = vmul.f32 %v455, %v561
    %v578 = vmul.f32 %v458, %v562
    %v579 = vmul.f32 %v461, %v563
    %v580 = vmul.f32 %v464, %v564
    %v581 = vmul.f32 %v467, %v565
    %v582 = vmul.f32 %v470, %v566
    %v583 = vmul.f32 %v473, %v567
    %v584 = vmul.f32 %v476, %v568
    %v585 = vmul.f32 %v479, %v569
    %v586 = vmul.f32 %v482, %v570
    %v587 = vmul.f32 %v485, %v571
    %v588 = vmul.f32 %v488, %v572
    %v589 = vmul.f32 %v491, %v573
    %v590 = vmul.f32 %v494, %v574
    %v591 = vmul.f32 %v575, %v409
    %v592 = vmul.f32 %v576, %v410
    %v593 = vmul.f32 %v577, %v411
    %v594 = vmul.f32 %v578, %v412
    %v595 = vmul.f32 %v579, %v413
    %v596 = vmul.f32 %v580, %v414
    %v597 = vmul.f32 %v581, %v415
    %v598 = vmul.f32 %v582, %v416
    %v599 = vmul.f32 %v583, %v417
    %v600 = vmul.f32 %v584, %v418
    %v601 = vmul.f32 %v585, %v419
    %v602 = vmul.f32 %v586, %v420
    %v603 = vmul.f32 %v587, %v421
    %v604 = vmul.f32 %v588, %v422
    %v605 = vmul.f32 %v589, %v423
    %v606 = vmul.f32 %v590, %v424
    %s607 = smul.u32 0, 128
    %v608 = vlaneseq
    %v609 = vshrl.u32 %v608, 7
    %v610 = vadd.s32 %v609, 8
    %v611 = vadd.s32 %v609, 16
    %v612 = vadd.s32 %v609, 24
    %v613 = vadd.s32 %v609, 32
    %v614 = vadd.s32 %v609, 40
    %v615 = vadd.s32 %v609, 48
    %v616 = vadd.s32 %v609, 56
    %v617 = vadd.s32 %v609, 64
    %v618 = vadd.s32 %v609, 72
    %v619 = vadd.s32 %v609, 80
    %v620 = vadd.s32 %v609, 88
    %v621 = vadd.s32 %v609, 96
    %v622 = vadd.s32 %v609, 104
    %v623 = vadd.s32 %v609, 112
    %v624 = vadd.s32 %v609, 120
    %v625 = vstv %s607
    %v626 = vadd.s32 %v625, %v609
    %v627 = vadd.s32 %v625, %v610
    %v628 = vadd.s32 %v625, %v611
    %v629 = vadd.s32 %v625, %v612
    %v630 = vadd.s32 %v625, %v613
    %v631 = vadd.s32 %v625, %v614
    %v632 = vadd.s32 %v625, %v615
    %v633 = vadd.s32 %v625, %v616
    %v634 = vadd.s32 %v625, %v617
    %v635 = vadd.s32 %v625, %v618
    %v636 = vadd.s32 %v625, %v619
    %v637 = vadd.s32 %v625, %v620
    %v638 = vadd.s32 %v625, %v621
    %v639 = vadd.s32 %v625, %v622
    %v640 = vadd.s32 %v625, %v623
    %v641 = vadd.s32 %v625, %v624
    %vm642 = vcmp.lt.s32.totalorder %v626, 16
    %vm643 = vcmp.lt.s32.totalorder %v627, 16
    %vm644 = vcmp.lt.s32.totalorder %v628, 16
    %vm645 = vcmp.lt.s32.totalorder %v629, 16
    %vm646 = vcmp.lt.s32.totalorder %v630, 16
    %vm647 = vcmp.lt.s32.totalorder %v631, 16
    %vm648 = vcmp.lt.s32.totalorder %v632, 16
    %vm649 = vcmp.lt.s32.totalorder %v633, 16
    %vm650 = vcmp.lt.s32.totalorder %v634, 16
    %vm651 = vcmp.lt.s32.totalorder %v635, 16
    %vm652 = vcmp.lt.s32.totalorder %v636, 16
    %vm653 = vcmp.lt.s32.totalorder %v637, 16
    %vm654 = vcmp.lt.s32.totalorder %v638, 16
    %vm655 = vcmp.lt.s32.totalorder %v639, 16
    %vm656 = vcmp.lt.s32.totalorder %v640, 16
    %vm657 = vcmp.lt.s32.totalorder %v641, 16
    %v658 = vsel %vm642, %v591, 0.0
    %v659 = vsel %vm643, %v592, 0.0
    %v660 = vsel %vm644, %v593, 0.0
    %v661 = vsel %vm645, %v594, 0.0
    %v662 = vsel %vm646, %v595, 0.0
    %v663 = vsel %vm647, %v596, 0.0
    %v664 = vsel %vm648, %v597, 0.0
    %v665 = vsel %vm649, %v598, 0.0
    %v666 = vsel %vm650, %v599, 0.0
    %v667 = vsel %vm651, %v600, 0.0
    %v668 = vsel %vm652, %v601, 0.0
    %v669 = vsel %vm653, %v602, 0.0
    %v670 = vsel %vm654, %v603, 0.0
    %v671 = vsel %vm655, %v604, 0.0
    %v672 = vsel %vm656, %v605, 0.0
    %v673 = vsel %vm657, %v606, 0.0
    %s674 = sld [smem:[#allocation2]]
    %vm675 = vcmask 7168
    %v676 = vsel %vm675, %v658, 0.0
    %v677 = vsel %vm675, %v659, 0.0
    %v678 = vadd.f32 %v676, %v677
    %v679 = vsel %vm675, %v660, 0.0
    %v680 = vadd.f32 %v678, %v679
    %v681 = vsel %vm675, %v661, 0.0
    %v682 = vadd.f32 %v680, %v681
    %v683 = vsel %vm675, %v662, 0.0
    %v684 = vadd.f32 %v682, %v683
    %v685 = vsel %vm675, %v663, 0.0
    %v686 = vadd.f32 %v684, %v685
    %v687 = vsel %vm675, %v664, 0.0
    %v688 = vadd.f32 %v686, %v687
    %v689 = vsel %vm675, %v665, 0.0
    %v690 = vadd.f32 %v688, %v689
    %v691 = vsel %vm675, %v666, 0.0
    %v692 = vadd.f32 %v690, %v691
    %v693 = vsel %vm675, %v667, 0.0
    %v694 = vadd.f32 %v692, %v693
    %v695 = vsel %vm675, %v668, 0.0
    %v696 = vadd.f32 %v694, %v695
    %v697 = vsel %vm675, %v669, 0.0
    %v698 = vadd.f32 %v696, %v697
    %v699 = vsel %vm675, %v670, 0.0
    %v700 = vadd.f32 %v698, %v699
    %v701 = vsel %vm675, %v671, 0.0
    %v702 = vadd.f32 %v700, %v701
    %v703 = vsel %vm675, %v672, 0.0
    %v704 = vadd.f32 %v702, %v703
    %v705 = vsel %vm675, %v673, 0.0
    %v706 = vadd.f32 %v704, %v705
    %707 = vadd.xlane.f32.xlu0 %v706
    %v708 = vpop.xlane.xlu0 %707
    %v709 = vrot.slane %v708, 4
    %v710 = vadd.f32 %v708, %v709
    %v711 = vrot.slane %v710, 2
    %v712 = vadd.f32 %v710, %v711
    %v713 = vrot.slane %v712, 1
    %v714 = vadd.f32 %v712, %v713
    %s715 = vtos %v714
    %s716 = sadd.f32 %s674, %s715
    %s717 = scalar_lea.smem [#allocation2], 0
    %718 = sst [smem:[%s717]] %s716
    // Predicated region
    $region18: #{tpu_custom_call.1} parent=1 // pred_check
      %p719 = pneg %p15
    $region19: #{tpu_custom_call.1} parent=1 // pred_check_branch
      %721 = sbr.rel (%p719) target = $region21
    $region20: #{tpu_custom_call.1} parent=1 // pred_region
      %s722 = sld [smem:[#allocation2]]
      %v723 = vrcp.pop 16.0
      %s724 = vtos %v723
      %s725 = smul.f32 %s722, %s724
      %s726 = scalar_lea.smem [#allocation3], 0
      %727 = sst [smem:[%s726]] %s725
    $region21: #{tpu_custom_call.1} parent=1 // pred_fallthru
      _
    // Predicated region
    $region22: #{tpu_custom_call.1} parent=1 // pred_check
      _
    $region23: #{tpu_custom_call.1} parent=1 // pred_check_branch
      %729 = sbr.rel (0) target = $region25
    $region24: #{tpu_custom_call.1} parent=1 // pred_region
      %s731 = ssub.s32 16, 16
      %732 = vsyncadd [#allocation4], %s731
      %735 = dma.smem_to_hbm [#allocation3], 16, %s3, [#allocation4]
    $region25: #{tpu_custom_call.1} parent=1 // pred_fallthru
      _
    // Predicated region
    $region26: #{tpu_custom_call.1} parent=1 // pred_check
      _
    $region27: #{tpu_custom_call.1} parent=1 // pred_check_branch
      %737 = sbr.rel (0) target = $region29
    $region28: #{tpu_custom_call.1} parent=1 // pred_region
      %738 = dma.done [#allocation4], 16
    $region29: #{tpu_custom_call.1} parent=1 // pred_fallthru
      _
    %739 = sfence
    %740 = vsyncpa [#allocation4], 1

</llo_original>
